<compile_context>
chip_gen: v5e
topology: v5e:2x2
jax: 0.10.0
libtpu: 0.0.40
codegen_flags: <defaults>
</compile_context>

<pallas_src>
import jax
import jax.numpy as jnp
from jax.experimental import pallas as pl
from jax.experimental.pallas import tpu as pltpu


def gnn_kernel(selA_ref, x_ref, time_ref, w12_ref, w2t_ref, b2_ref, w3_ref, b3_ref,
               out_ref):
    bg, b, _ = selA_ref.shape
    f = x_ref.shape[-1]
    r = bg * b

    # Per-graph ego aggregation, batched over the BG graphs of this grid step.
    # N-contraction runs at width F (=4), f32 accumulation on the MXU.
    sx = jnp.einsum('gbn,gnf->gbf', selA_ref[...], x_ref[...],
                    preferred_element_type=jnp.float32)            # (BG, B, F) f32

    # Shared-weight MLP on the flattened (BG*B, .) activation -> one matmul per layer.
    sx2 = sx.reshape(r, f)
    t2 = time_ref[...].reshape(r, 1)                               # ego_time, f32

    # concat([ego_feat, ego_time]) @ W2 + b2  ==  sx @ W12 + t * W2t + b2'
    z = (jnp.dot(sx2.astype(jnp.bfloat16), w12_ref[...],
                 preferred_element_type=jnp.float32)
         + t2 * w2t_ref[...]
         + b2_ref[...])
    z = jnp.maximum(z, 0.0)                                        # ReLU (f32 on VPU)

    y = jnp.dot(z.astype(jnp.bfloat16), w3_ref[...],
                preferred_element_type=jnp.float32) + b3_ref[...]
    out_ref[...] = jax.nn.sigmoid(y).reshape(out_ref.shape)        # last_layer_activation


def simple_gnn_forward(selA, x, ego_time, params, *, graphs_per_step=8):
    """selA: [G,B,N] (ego rows of A_norm), x: [G,N,F], ego_time: [G,B,1]."""
    w12, w2t, b2p, w3, b3 = params
    G, B, N = selA.shape
    F = x.shape[-1]
    Hh = w12.shape[1]
    OUT = w3.shape[1]

    BG = min(graphs_per_step, G)
    assert G % BG == 0, "G must be a multiple of graphs_per_step"
    steps = G // BG

    # bf16 MXU operands, f32 accumulation inside the kernel; biases/time stay f32.
    selA_bf = selA.astype(jnp.bfloat16)
    x_bf = x.astype(jnp.bfloat16)
    w12_bf = w12.astype(jnp.bfloat16)
    w3_bf = w3.astype(jnp.bfloat16)

    # VMEM budget (per step, double buffered): 2*(BG*B*N + BG*N*F)*2B + weights + outs.
    # Tiny at these shapes; cap BG against 64 MiB on v7x if N grows.
    flops = 2 * G * B * (N * F + F * Hh + Hh * OUT)
    transcendentals = G * B * OUT
    bytes_accessed = ((selA_bf.size + x_bf.size + w12_bf.size + w3_bf.size) * 2
                      + (ego_time.size + w2t.size + b2p.size + b3.size) * 4
                      + G * B * OUT * 4)

    return pl.pallas_call(
        gnn_kernel,
        out_shape=jax.ShapeDtypeStruct((G, B, OUT), jnp.float32),
        grid_spec=pltpu.PrefetchScalarGridSpec(
            num_scalar_prefetch=0,
            grid=(steps,),
            in_specs=[
                pl.BlockSpec((BG, B, N), lambda g: (g, 0, 0)),   # selA  (per step)
                pl.BlockSpec((BG, N, F), lambda g: (g, 0, 0)),   # node features
                pl.BlockSpec((BG, B, 1), lambda g: (g, 0, 0)),   # ego_time
                pl.BlockSpec((F, Hh), lambda g: (0, 0)),         # W12 = W1 @ W2a (shared)
                pl.BlockSpec((1, Hh), lambda g: (0, 0)),         # W2t (shared)
                pl.BlockSpec((1, Hh), lambda g: (0, 0)),         # b2' = b1@W2a + b2
                pl.BlockSpec((Hh, OUT), lambda g: (0, 0)),       # W3 (shared)
                pl.BlockSpec((1, OUT), lambda g: (0, 0)),        # b3 (shared)
            ],
            out_specs=pl.BlockSpec((BG, B, OUT), lambda g: (g, 0, 0)),
        ),
        compiler_params=pltpu.CompilerParams(
            dimension_semantics=("parallel",),       # graph-step axis -> both TCs on v7x
            vmem_limit_bytes=32 * 1024 * 1024,
        ),
        cost_estimate=pl.CostEstimate(flops=flops,
                                      transcendentals=transcendentals,
                                      bytes_accessed=bytes_accessed),
    )(selA_bf, x_bf, ego_time, w12_bf, w2t, b2p, w3_bf, b3)


def build_norm_adj(edge_index, num_nodes):
    """Dense D^-1/2 (A + I) D^-1/2 matching GCNConv(add_self_loops=True, normalize=True).

    With edge_weight=None (all ones), PyG's gcn_norm scatter-adds duplicate non-self-loop
    edges and ends up with exactly one weight-1 self-loop per node (existing self-loop
    edges collapse to weight 1) -- which is exactly what this builds.
    """
    src, dst = edge_index[0], edge_index[1]
    w = jnp.where(src != dst, 1.0, 0.0)
    adj = jnp.zeros((num_nodes, num_nodes), jnp.float32).at[dst, src].add(w)
    adj = adj + jnp.eye(num_nodes, dtype=jnp.float32)
    deg = adj.sum(axis=1)
    dinv = jnp.where(deg > 0, jax.lax.rsqrt(deg), 0.0)
    return dinv[:, None] * adj * dinv[None, :]


def reference_module(adj_norm, data, ego_idx, ego_time, w1, b1, w2_full, b2, w3, b3):
    """Pure-JAX f32 reference following the original module flow exactly."""
    h = adj_norm @ (data @ w1) + b1
    ego = h[ego_idx]
    cat = jnp.concatenate([ego, ego_time[:, None]], axis=-1)
    z = jnp.maximum(cat @ w2_full + b2, 0.0)
    return jax.nn.sigmoid(z @ w3 + b3)


def reference_bf16(selA, x, ego_time, params):
    """Pure-JAX reference mirroring the kernel's fused bf16-operand / f32-accumulate flow."""
    w12, w2t, b2p, w3, b3 = params
    selA_bf = selA.astype(jnp.bfloat16)
    x_bf = x.astype(jnp.bfloat16)
    w12_bf = w12.astype(jnp.bfloat16)
    w3_bf = w3.astype(jnp.bfloat16)
    outs = []
    for g in range(selA.shape[0]):
        sx = jnp.dot(selA_bf[g], x_bf[g], preferred_element_type=jnp.float32)
        z = jnp.maximum(
            jnp.dot(sx.astype(jnp.bfloat16), w12_bf, preferred_element_type=jnp.float32)
            + ego_time[g] * w2t + b2p, 0.0)
        y = jnp.dot(z.astype(jnp.bfloat16), w3_bf, preferred_element_type=jnp.float32) + b3
        outs.append(jax.nn.sigmoid(y))
    return jnp.stack(outs)


if __name__ == "__main__":
    # Small, module-consistent shapes; G graphs batched BG-per-grid-step in one pallas_call.
    G = 16            # graphs in one kernel call
    BG = 8            # graphs per grid step  (grid = G//BG = 2 -> both TCs on v7x)
    N = 16            # nodes per graph
    F = 4             # node_feature_size (GCNConv(4, hidden))
    H = 32            # hidden_size
    OUT = 2           # output_size
    B = 4             # ego nodes per graph (== ego_mask.sum())
    E = 32            # edges per graph

    key = jax.random.PRNGKey(0)
    k_params, k_graphs = jax.random.split(key)
    k_w1, k_b1, k_w2, k_b2, k_w3, k_b3 = jax.random.split(k_params, 6)

    # Deterministic parameter init (GCNConv weight/bias + two Linear layers).
    w1 = jax.random.normal(k_w1, (F, H), jnp.float32) * 0.1
    b1 = jax.random.normal(k_b1, (1, H), jnp.float32) * 0.1
    w2_full = jax.random.normal(k_w2, (H + 1, H // 2), jnp.float32) * 0.1
    w2a, w2t = w2_full[:H], w2_full[H:H + 1]          # split: [H, H/2] and [1, H/2]
    b2 = jax.random.normal(k_b2, (1, H // 2), jnp.float32) * 0.1
    w3 = jax.random.normal(k_w3, (H // 2, OUT), jnp.float32) * 0.1
    b3 = jax.random.normal(k_b3, (1, OUT), jnp.float32) * 0.1

    # Offline fusions (f32): W1 folded into the first Linear, GCN bias folded into b2.
    w12 = w1 @ w2a                     # [F, H/2]
    b2p = b1 @ w2a + b2                # [1, H/2]
    params = (w12, w2t, b2p, w3, b3)

    # Glue: per-graph inputs.  (The `batch` vector of the module is unused in its forward.)
    selA_list, x_list, t_list, refs = [], [], [], []
    for g in range(G):
        kg = jax.random.fold_in(k_graphs, g)
        k_x, k_e, k_t, k_i = jax.random.split(kg, 4)
        data = jax.random.normal(k_x, (N, F), jnp.float32)
        edge_index = jax.random.randint(k_e, (2, E), 0, N)
        ego_idx = jax.random.choice(k_i, N, (B,), replace=False).astype(jnp.int32)
        ego_time = jax.random.uniform(k_t, (B,), jnp.float32)

        adj = build_norm_adj(edge_index, N)
        selA_list.append(adj[ego_idx])                # == one_hot(ego_idx) @ A_norm, [B,N]
        x_list.append(data)
        t_list.append(ego_time[:, None])
        refs.append(reference_module(adj, data, ego_idx, ego_time,
                                     w1, b1, w2_full, b2, w3, b3))

    selA = jnp.stack(selA_list)        # [G, B, N]
    x = jnp.stack(x_list)              # [G, N, F]
    ego_time = jnp.stack(t_list)       # [G, B, 1]
    ref_mod = jnp.stack(refs)          # [G, B, OUT]

    out = simple_gnn_forward(selA, x, ego_time, params, graphs_per_step=BG)
    out = jax.block_until_ready(out)

    ref_bf = reference_bf16(selA, x, ego_time, params)
    assert out.shape == (G, B, OUT)
    # Exact-flow check (same fused bf16 operands / f32 accumulation as the kernel).
    assert jnp.allclose(out, ref_bf, atol=1e-4, rtol=1e-4)
    # Semantic check against the full-f32 original-module math (bf16-level tolerance).
    assert jnp.allclose(out, ref_mod, atol=2e-2, rtol=2e-2)
    print("KERNEL_OK")
</pallas_src>

<mosaic_0001>
module attributes {stable_mosaic.version = 11 : i64} {
  func.func @gnn_kernel(%arg0: i32, %arg1: memref<8x4x16xbf16, #tpu.memory_space<vmem>>, %arg2: memref<8x16x4xbf16, #tpu.memory_space<vmem>>, %arg3: memref<8x4x1xf32, #tpu.memory_space<vmem>>, %arg4: memref<4x16xbf16, #tpu.memory_space<vmem>>, %arg5: memref<1x16xf32, #tpu.memory_space<vmem>>, %arg6: memref<1x16xf32, #tpu.memory_space<vmem>>, %arg7: memref<16x2xbf16, #tpu.memory_space<vmem>>, %arg8: memref<1x2xf32, #tpu.memory_space<vmem>>, %arg9: memref<8x4x2xf32, #tpu.memory_space<vmem>>) attributes {dimension_semantics = [#tpu.dimension_semantics<parallel>], iteration_bounds = array<i64: 2>, scalar_prefetch = 0 : i64, scratch_operands = 0 : i64, tpu.core_type = #tpu.core_type<tc>, window_params = [{transform_indices = @transform_0, window_bounds = array<i64: 8, 4, 16>}, {transform_indices = @transform_1, window_bounds = array<i64: 8, 16, 4>}, {transform_indices = @transform_2, window_bounds = array<i64: 8, 4, 1>}, {pipeline_mode = #tpu.pipeline_mode<synchronous>, transform_indices = @transform_3, window_bounds = array<i64: 4, 16>}, {pipeline_mode = #tpu.pipeline_mode<synchronous>, transform_indices = @transform_4, window_bounds = array<i64: 1, 16>}, {pipeline_mode = #tpu.pipeline_mode<synchronous>, transform_indices = @transform_5, window_bounds = array<i64: 1, 16>}, {pipeline_mode = #tpu.pipeline_mode<synchronous>, transform_indices = @transform_6, window_bounds = array<i64: 16, 2>}, {pipeline_mode = #tpu.pipeline_mode<synchronous>, transform_indices = @transform_7, window_bounds = array<i64: 1, 2>}, {transform_indices = @transform_8, window_bounds = array<i64: 8, 4, 2>}]} {
    %c0 = arith.constant 0 : index
    %c0_0 = arith.constant 0 : index
    %c0_1 = arith.constant 0 : index
    %0 = vector.load %arg1[%c0, %c0_0, %c0_1] : memref<8x4x16xbf16, #tpu.memory_space<vmem>>, vector<8x4x16xbf16>
    %c0_2 = arith.constant 0 : index
    %c0_3 = arith.constant 0 : index
    %c0_4 = arith.constant 0 : index
    %1 = vector.load %arg2[%c0_2, %c0_3, %c0_4] : memref<8x16x4xbf16, #tpu.memory_space<vmem>>, vector<8x16x4xbf16>
    "tpu.trace_start"() <{level = 10 : i32, message = "gbn,gnf->gbf"}> : () -> ()
    %cst = arith.constant dense<0.000000e+00> : vector<8x4x4xf32>
    %2 = tpu.matmul %0, %1, %cst {dimension_numbers = #tpu.dot_dimension_numbers<[2], [1], [1], [2], [0, 0, 0, 1, 1, 2], [0], [0]>} : vector<8x4x16xbf16>, vector<8x16x4xbf16>, vector<8x4x4xf32> -> vector<8x4x4xf32>
    "tpu.trace_stop"() : () -> ()
    %3 = vector.shape_cast %2 : vector<8x4x4xf32> to vector<32x4xf32>
    %c0_5 = arith.constant 0 : index
    %c0_6 = arith.constant 0 : index
    %c0_7 = arith.constant 0 : index
    %4 = vector.load %arg3[%c0_5, %c0_6, %c0_7] : memref<8x4x1xf32, #tpu.memory_space<vmem>>, vector<8x4x1xf32>
    %5 = vector.shape_cast %4 : vector<8x4x1xf32> to vector<32x1xf32>
    %6 = arith.truncf %3 : vector<32x4xf32> to vector<32x4xbf16>
    %c0_8 = arith.constant 0 : index
    %c0_9 = arith.constant 0 : index
    %7 = vector.load %arg4[%c0_8, %c0_9] : memref<4x16xbf16, #tpu.memory_space<vmem>>, vector<4x16xbf16>
    %cst_10 = arith.constant dense<0.000000e+00> : vector<32x16xf32>
    %8 = tpu.matmul %6, %7, %cst_10 {dimension_numbers = #tpu.dot_dimension_numbers<[1], [0], [0], [1], [0, 0, 1, 1], [], []>} : vector<32x4xbf16>, vector<4x16xbf16>, vector<32x16xf32> -> vector<32x16xf32>
    %c0_11 = arith.constant 0 : index
    %c0_12 = arith.constant 0 : index
    %9 = vector.load %arg5[%c0_11, %c0_12] : memref<1x16xf32, #tpu.memory_space<vmem>>, vector<1x16xf32>
    %10 = vector.broadcast %5 : vector<32x1xf32> to vector<32x16xf32>
    %11 = vector.broadcast %9 : vector<1x16xf32> to vector<32x16xf32>
    %12 = arith.mulf %10, %11 : vector<32x16xf32>
    %13 = arith.addf %8, %12 : vector<32x16xf32>
    %c0_13 = arith.constant 0 : index
    %c0_14 = arith.constant 0 : index
    %14 = vector.load %arg6[%c0_13, %c0_14] : memref<1x16xf32, #tpu.memory_space<vmem>>, vector<1x16xf32>
    %15 = vector.broadcast %14 : vector<1x16xf32> to vector<32x16xf32>
    %16 = arith.addf %13, %15 : vector<32x16xf32>
    %cst_15 = arith.constant 0.000000e+00 : f32
    %17 = vector.broadcast %cst_15 : f32 to vector<32x16xf32>
    %18 = arith.maximumf %16, %17 : vector<32x16xf32>
    %19 = arith.truncf %18 : vector<32x16xf32> to vector<32x16xbf16>
    %c0_16 = arith.constant 0 : index
    %c0_17 = arith.constant 0 : index
    %20 = vector.load %arg7[%c0_16, %c0_17] : memref<16x2xbf16, #tpu.memory_space<vmem>>, vector<16x2xbf16>
    %cst_18 = arith.constant dense<0.000000e+00> : vector<32x2xf32>
    %21 = tpu.matmul %19, %20, %cst_18 {dimension_numbers = #tpu.dot_dimension_numbers<[1], [0], [0], [1], [0, 0, 1, 1], [], []>} : vector<32x16xbf16>, vector<16x2xbf16>, vector<32x2xf32> -> vector<32x2xf32>
    %c0_19 = arith.constant 0 : index
    %c0_20 = arith.constant 0 : index
    %22 = vector.load %arg8[%c0_19, %c0_20] : memref<1x2xf32, #tpu.memory_space<vmem>>, vector<1x2xf32>
    %23 = vector.broadcast %22 : vector<1x2xf32> to vector<32x2xf32>
    %24 = arith.addf %21, %23 : vector<32x2xf32>
    %25 = arith.negf %24 : vector<32x2xf32>
    %26 = math.exp %25 : vector<32x2xf32>
    %cst_21 = arith.constant 1.000000e+00 : f32
    %27 = vector.broadcast %cst_21 : f32 to vector<32x2xf32>
    %28 = arith.addf %27, %26 : vector<32x2xf32>
    %29 = arith.divf %27, %28 : vector<32x2xf32>
    %30 = vector.shape_cast %29 : vector<32x2xf32> to vector<8x4x2xf32>
    %c0_22 = arith.constant 0 : index
    %c0_23 = arith.constant 0 : index
    %c0_24 = arith.constant 0 : index
    %31 = vector.load %arg9[%c0_22, %c0_23, %c0_24] : memref<8x4x2xf32, #tpu.memory_space<vmem>>, vector<8x4x2xf32>
    tpu.vector_store %arg9[%c0_22, %c0_23, %c0_24], %30 {strides = array<i32>} : memref<8x4x2xf32, #tpu.memory_space<vmem>>, vector<8x4x2xf32>,
    return
  }
  func.func @transform_0(%arg0: i32) -> (i32, i32, i32) {
    %c0_i32 = arith.constant 0 : i32
    %c0_i32_0 = arith.constant 0 : i32
    %c0_i32_1 = arith.constant 0 : i32
    return %arg0, %c0_i32, %c0_i32_0 : i32, i32, i32
  }
  func.func @transform_1(%arg0: i32) -> (i32, i32, i32) {
    %c0_i32 = arith.constant 0 : i32
    %c0_i32_0 = arith.constant 0 : i32
    %c0_i32_1 = arith.constant 0 : i32
    return %arg0, %c0_i32, %c0_i32_0 : i32, i32, i32
  }
  func.func @transform_2(%arg0: i32) -> (i32, i32, i32) {
    %c0_i32 = arith.constant 0 : i32
    %c0_i32_0 = arith.constant 0 : i32
    %c0_i32_1 = arith.constant 0 : i32
    return %arg0, %c0_i32, %c0_i32_0 : i32, i32, i32
  }
  func.func @transform_3(%arg0: i32) -> (i32, i32) {
    %c0_i32 = arith.constant 0 : i32
    %c0_i32_0 = arith.constant 0 : i32
    %c0_i32_1 = arith.constant 0 : i32
    return %c0_i32, %c0_i32_0 : i32, i32
  }
  func.func @transform_4(%arg0: i32) -> (i32, i32) {
    %c0_i32 = arith.constant 0 : i32
    %c0_i32_0 = arith.constant 0 : i32
    %c0_i32_1 = arith.constant 0 : i32
    return %c0_i32, %c0_i32_0 : i32, i32
  }
  func.func @transform_5(%arg0: i32) -> (i32, i32) {
    %c0_i32 = arith.constant 0 : i32
    %c0_i32_0 = arith.constant 0 : i32
    %c0_i32_1 = arith.constant 0 : i32
    return %c0_i32, %c0_i32_0 : i32, i32
  }
  func.func @transform_6(%arg0: i32) -> (i32, i32) {
    %c0_i32 = arith.constant 0 : i32
    %c0_i32_0 = arith.constant 0 : i32
    %c0_i32_1 = arith.constant 0 : i32
    return %c0_i32, %c0_i32_0 : i32, i32
  }
  func.func @transform_7(%arg0: i32) -> (i32, i32) {
    %c0_i32 = arith.constant 0 : i32
    %c0_i32_0 = arith.constant 0 : i32
    %c0_i32_1 = arith.constant 0 : i32
    return %c0_i32, %c0_i32_0 : i32, i32
  }
  func.func @transform_8(%arg0: i32) -> (i32, i32, i32) {
    %c0_i32 = arith.constant 0 : i32
    %c0_i32_0 = arith.constant 0 : i32
    %c0_i32_1 = arith.constant 0 : i32
    return %arg0, %c0_i32, %c0_i32_0 : i32, i32, i32
  }
}

</mosaic_0001>

<llo_original>
// kernel: tpu_custom_call.1
$region0: #{tpu_custom_call.1}
  #allocation0 [shape = 'u32[]', space=smem, size = 0x4, offset = 0x4, fixed_abs, tag = 'smem constant byte address 0x4 - core index']
  #allocation1 [shape = 'u32[72,128]{1,0:T(1,128)}', space=vmem, size = 0x9000, scoped, tag = 'internal scratch']
  %s0 = inlined_call_operand.vmem [shape: bf16[16,4,16], index: 0, kind: input, shape index: {}]
  %s1 = inlined_call_operand.vmem [shape: bf16[16,16,4], index: 1, kind: input, shape index: {}]
  %s2 = inlined_call_operand.vmem [shape: f32[16,4,1], index: 2, kind: input, shape index: {}]
  %s3 = inlined_call_operand.vmem [shape: bf16[4,16], index: 3, kind: input, shape index: {}]
  %s4 = inlined_call_operand.vmem [shape: f32[1,16], index: 4, kind: input, shape index: {}]
  %s5 = inlined_call_operand.vmem [shape: f32[1,16], index: 5, kind: input, shape index: {}]
  %s6 = inlined_call_operand.vmem [shape: bf16[16,2], index: 6, kind: input, shape index: {}]
  %s7 = inlined_call_operand.vmem [shape: f32[1,2], index: 7, kind: input, shape index: {}]
  %s8 = inlined_call_operand.vmem [shape: f32[16,4,2], index: 8, kind: output, shape index: {}]
  %s9 = sld [smem:[#allocation0]]
  $region65: #{tpu_custom_call.1} parent=0
    _
  %s11 = ssub.s32 1, %s9
  %s12 = scalar_select 0, %s11, %s9
  loop: start=0, step=1, limit=4
  $region2: #{tpu_custom_call.1} parent=0 // loop_pre_header
    _
  $region3: #{tpu_custom_call.1} parent=0 // loop_header
    %s14 = sphi 0, %s18
    %p15 = scmp.ge.s32.totalorder %s14, 4
    %s24 = sphi 0, %s26
    %s27 = sphi 0, %s24
    %s28 = sphi 0, %s27
    %s44 = sphi 0, %s28
    %s50 = sphi 0, %s52
    %s53 = sphi 0, %s50
    %s54 = sphi 0, %s53
    %s70 = sphi 0, %s54
    %s76 = sphi 0, %s78
    %s79 = sphi 0, %s76
    %s80 = sphi 0, %s79
    %s96 = sphi 0, %s80
    %s100 = sphi 0, %s100
    %s102 = sphi 0, %s100
    %s103 = sphi 0, %s102
    %s117 = sphi 0, %s103
    %s121 = sphi 0, %s121
    %s123 = sphi 0, %s121
    %s124 = sphi 0, %s123
    %s138 = sphi 0, %s124
    %s142 = sphi 0, %s142
    %s144 = sphi 0, %s142
    %s145 = sphi 0, %s144
    %s159 = sphi 0, %s145
    %s163 = sphi 0, %s163
    %s165 = sphi 0, %s163
    %s166 = sphi 0, %s165
    %s180 = sphi 0, %s166
    %s184 = sphi 0, %s184
    %s186 = sphi 0, %s184
    %s187 = sphi 0, %s186
    %s201 = sphi 0, %s187
    %s207 = sphi 0, %s209
    %s210 = sphi 0, %s207
    %s211 = sphi 0, %s210
    %s227 = sphi 0, %s211
  $region4: #{tpu_custom_call.1} parent=0 // loop_header_branch
    %17 = sbr.rel (%p15) target = $region8
  $region5: #{tpu_custom_call.1} parent=0 // loop_body
    %s19 = ssub.s32 %s14, 1
    %s20 = ssub.s32 %s14, 2
    %s21 = sadd.s32 %s14, 1
    %s22 = ssub.s32 %s14, %s21
    %p23 = scmp.eq.s32.totalorder %s22, 0
    %s25 = sadd.s32 %s24, 1
    %s26 = scalar_select %p23, %s24, %s25
    %p29 = pneg %p23
    %p30 = scmp.eq.s32.totalorder %s14, 1
    %p31 = por %p29, %p30
    %p32 = scmp.ne.s32.totalorder %s24, %s27
    %p33 = scmp.eq.s32.totalorder %s14, 0
    %p34 = por %p32, %p33
    %p35 = scmp.ne.s32.totalorder %s24, %s27
    %p36 = scmp.eq.s32.totalorder %s19, 1
    %p37 = por %p35, %p36
    %p38 = scmp.ne.s32.totalorder %s27, %s28
    %p39 = scmp.eq.s32.totalorder %s19, 0
    %p40 = por %p38, %p39
    %p41 = scmp.ne.s32.totalorder %s27, %s28
    %p42 = scmp.eq.s32.totalorder %s20, 1
    %p43 = por %p41, %p42
    %p45 = scmp.ne.s32.totalorder %s28, %s44
    %p46 = scmp.eq.s32.totalorder %s20, 0
    %p47 = por %p45, %p46
    %s48 = ssub.s32 %s14, %s21
    %p49 = scmp.eq.s32.totalorder %s48, 0
    %s51 = sadd.s32 %s50, 1
    %s52 = scalar_select %p49, %s50, %s51
    %p55 = pneg %p49
    %p56 = scmp.eq.s32.totalorder %s14, 1
    %p57 = por %p55, %p56
    %p58 = scmp.ne.s32.totalorder %s50, %s53
    %p59 = scmp.eq.s32.totalorder %s14, 0
    %p60 = por %p58, %p59
    %p61 = scmp.ne.s32.totalorder %s50, %s53
    %p62 = scmp.eq.s32.totalorder %s19, 1
    %p63 = por %p61, %p62
    %p64 = scmp.ne.s32.totalorder %s53, %s54
    %p65 = scmp.eq.s32.totalorder %s19, 0
    %p66 = por %p64, %p65
    %p67 = scmp.ne.s32.totalorder %s53, %s54
    %p68 = scmp.eq.s32.totalorder %s20, 1
    %p69 = por %p67, %p68
    %p71 = scmp.ne.s32.totalorder %s54, %s70
    %p72 = scmp.eq.s32.totalorder %s20, 0
    %p73 = por %p71, %p72
    %s74 = ssub.s32 %s14, %s21
    %p75 = scmp.eq.s32.totalorder %s74, 0
    %s77 = sadd.s32 %s76, 1
    %s78 = scalar_select %p75, %s76, %s77
    %p81 = pneg %p75
    %p82 = scmp.eq.s32.totalorder %s14, 1
    %p83 = por %p81, %p82
    %p84 = scmp.ne.s32.totalorder %s76, %s79
    %p85 = scmp.eq.s32.totalorder %s14, 0
    %p86 = por %p84, %p85
    %p87 = scmp.ne.s32.totalorder %s76, %s79
    %p88 = scmp.eq.s32.totalorder %s19, 1
    %p89 = por %p87, %p88
    %p90 = scmp.ne.s32.totalorder %s79, %s80
    %p91 = scmp.eq.s32.totalorder %s19, 0
    %p92 = por %p90, %p91
    %p93 = scmp.ne.s32.totalorder %s79, %s80
    %p94 = scmp.eq.s32.totalorder %s20, 1
    %p95 = por %p93, %p94
    %p97 = scmp.ne.s32.totalorder %s80, %s96
    %p98 = scmp.eq.s32.totalorder %s20, 0
    %p99 = por %p97, %p98
    %s101 = sadd.s32 %s100, 1
    %p104 = scmp.eq.s32.totalorder %s14, 1
    %p105 = scmp.ne.s32.totalorder %s100, %s102
    %p106 = scmp.eq.s32.totalorder %s14, 0
    %p107 = por %p105, %p106
    %p108 = scmp.ne.s32.totalorder %s100, %s102
    %p109 = scmp.eq.s32.totalorder %s19, 1
    %p110 = por %p108, %p109
    %p111 = scmp.ne.s32.totalorder %s102, %s103
    %p112 = scmp.eq.s32.totalorder %s19, 0
    %p113 = por %p111, %p112
    %p114 = scmp.ne.s32.totalorder %s102, %s103
    %p115 = scmp.eq.s32.totalorder %s20, 1
    %p116 = por %p114, %p115
    %p118 = scmp.ne.s32.totalorder %s103, %s117
    %p119 = scmp.eq.s32.totalorder %s20, 0
    %p120 = por %p118, %p119
    %s122 = sadd.s32 %s121, 1
    %p125 = scmp.eq.s32.totalorder %s14, 1
    %p126 = scmp.ne.s32.totalorder %s121, %s123
    %p127 = scmp.eq.s32.totalorder %s14, 0
    %p128 = por %p126, %p127
    %p129 = scmp.ne.s32.totalorder %s121, %s123
    %p130 = scmp.eq.s32.totalorder %s19, 1
    %p131 = por %p129, %p130
    %p132 = scmp.ne.s32.totalorder %s123, %s124
    %p133 = scmp.eq.s32.totalorder %s19, 0
    %p134 = por %p132, %p133
    %p135 = scmp.ne.s32.totalorder %s123, %s124
    %p136 = scmp.eq.s32.totalorder %s20, 1
    %p137 = por %p135, %p136
    %p139 = scmp.ne.s32.totalorder %s124, %s138
    %p140 = scmp.eq.s32.totalorder %s20, 0
    %p141 = por %p139, %p140
    %s143 = sadd.s32 %s142, 1
    %p146 = scmp.eq.s32.totalorder %s14, 1
    %p147 = scmp.ne.s32.totalorder %s142, %s144
    %p148 = scmp.eq.s32.totalorder %s14, 0
    %p149 = por %p147, %p148
    %p150 = scmp.ne.s32.totalorder %s142, %s144
    %p151 = scmp.eq.s32.totalorder %s19, 1
    %p152 = por %p150, %p151
    %p153 = scmp.ne.s32.totalorder %s144, %s145
    %p154 = scmp.eq.s32.totalorder %s19, 0
    %p155 = por %p153, %p154
    %p156 = scmp.ne.s32.totalorder %s144, %s145
    %p157 = scmp.eq.s32.totalorder %s20, 1
    %p158 = por %p156, %p157
    %p160 = scmp.ne.s32.totalorder %s145, %s159
    %p161 = scmp.eq.s32.totalorder %s20, 0
    %p162 = por %p160, %p161
    %s164 = sadd.s32 %s163, 1
    %p167 = scmp.eq.s32.totalorder %s14, 1
    %p168 = scmp.ne.s32.totalorder %s163, %s165
    %p169 = scmp.eq.s32.totalorder %s14, 0
    %p170 = por %p168, %p169
    %p171 = scmp.ne.s32.totalorder %s163, %s165
    %p172 = scmp.eq.s32.totalorder %s19, 1
    %p173 = por %p171, %p172
    %p174 = scmp.ne.s32.totalorder %s165, %s166
    %p175 = scmp.eq.s32.totalorder %s19, 0
    %p176 = por %p174, %p175
    %p177 = scmp.ne.s32.totalorder %s165, %s166
    %p178 = scmp.eq.s32.totalorder %s20, 1
    %p179 = por %p177, %p178
    %p181 = scmp.ne.s32.totalorder %s166, %s180
    %p182 = scmp.eq.s32.totalorder %s20, 0
    %p183 = por %p181, %p182
    %s185 = sadd.s32 %s184, 1
    %p188 = scmp.eq.s32.totalorder %s14, 1
    %p189 = scmp.ne.s32.totalorder %s184, %s186
    %p190 = scmp.eq.s32.totalorder %s14, 0
    %p191 = por %p189, %p190
    %p192 = scmp.ne.s32.totalorder %s184, %s186
    %p193 = scmp.eq.s32.totalorder %s19, 1
    %p194 = por %p192, %p193
    %p195 = scmp.ne.s32.totalorder %s186, %s187
    %p196 = scmp.eq.s32.totalorder %s19, 0
    %p197 = por %p195, %p196
    %p198 = scmp.ne.s32.totalorder %s186, %s187
    %p199 = scmp.eq.s32.totalorder %s20, 1
    %p200 = por %p198, %p199
    %p202 = scmp.ne.s32.totalorder %s187, %s201
    %p203 = scmp.eq.s32.totalorder %s20, 0
    %p204 = por %p202, %p203
    %s205 = ssub.s32 %s14, %s21
    %p206 = scmp.eq.s32.totalorder %s205, 0
    %s208 = sadd.s32 %s207, 1
    %s209 = scalar_select %p206, %s207, %s208
    %p212 = pneg %p206
    %p213 = scmp.eq.s32.totalorder %s14, 1
    %p214 = por %p212, %p213
    %p215 = scmp.ne.s32.totalorder %s207, %s210
    %p216 = scmp.eq.s32.totalorder %s14, 0
    %p217 = por %p215, %p216
    %p218 = scmp.ne.s32.totalorder %s207, %s210
    %p219 = scmp.eq.s32.totalorder %s19, 1
    %p220 = por %p218, %p219
    %p221 = scmp.ne.s32.totalorder %s210, %s211
    %p222 = scmp.eq.s32.totalorder %s19, 0
    %p223 = por %p221, %p222
    %p224 = scmp.ne.s32.totalorder %s210, %s211
    %p225 = scmp.eq.s32.totalorder %s20, 1
    %p226 = por %p224, %p225
    %p228 = scmp.ne.s32.totalorder %s211, %s227
    %p229 = scmp.eq.s32.totalorder %s20, 0
    %p230 = por %p228, %p229
    %p231 = scmp.le.s32.totalorder 1, %s14
    %p232 = scmp.lt.s32.totalorder %s14, 3
    %p233 = pnand %p231, %p232
    %p234 = pneg %p233
    // Predicated region
    $region9: #{tpu_custom_call.1} parent=5 // pred_check
      _
    $region10: #{tpu_custom_call.1} parent=5 // pred_check_branch
      %236 = sbr.rel (%p233) target = $region12
    $region11: #{tpu_custom_call.1} parent=5 // pred_region
      %s237 = ssub.s32 %s14, 1
      // Predicated region
      $region13: #{tpu_custom_call.1} parent=11 // pred_check
        %p238 = pneg %p113
      $region14: #{tpu_custom_call.1} parent=11 // pred_check_branch
        %240 = sbr.rel (%p238) target = $region16
      $region15: #{tpu_custom_call.1} parent=11 // pred_region
        _
      $region16: #{tpu_custom_call.1} parent=11 // pred_fallthru
        _
      // Predicated region
      $region17: #{tpu_custom_call.1} parent=11 // pred_check
        %p241 = pneg %p134
      $region18: #{tpu_custom_call.1} parent=11 // pred_check_branch
        %243 = sbr.rel (%p241) target = $region20
      $region19: #{tpu_custom_call.1} parent=11 // pred_region
        _
      $region20: #{tpu_custom_call.1} parent=11 // pred_fallthru
        _
      // Predicated region
      $region21: #{tpu_custom_call.1} parent=11 // pred_check
        %p244 = pneg %p155
      $region22: #{tpu_custom_call.1} parent=11 // pred_check_branch
        %246 = sbr.rel (%p244) target = $region24
      $region23: #{tpu_custom_call.1} parent=11 // pred_region
        _
      $region24: #{tpu_custom_call.1} parent=11 // pred_fallthru
        _
      // Predicated region
      $region25: #{tpu_custom_call.1} parent=11 // pred_check
        %p247 = pneg %p176
      $region26: #{tpu_custom_call.1} parent=11 // pred_check_branch
        %249 = sbr.rel (%p247) target = $region28
      $region27: #{tpu_custom_call.1} parent=11 // pred_region
        _
      $region28: #{tpu_custom_call.1} parent=11 // pred_fallthru
        _
      // Predicated region
      $region29: #{tpu_custom_call.1} parent=11 // pred_check
        %p250 = pneg %p197
      $region30: #{tpu_custom_call.1} parent=11 // pred_check_branch
        %252 = sbr.rel (%p250) target = $region32
      $region31: #{tpu_custom_call.1} parent=11 // pred_region
        _
      $region32: #{tpu_custom_call.1} parent=11 // pred_fallthru
        _
    $region12: #{tpu_custom_call.1} parent=5 // pred_fallthru
      _
    %p253 = scmp.lt.s32.totalorder %s14, 2
    // Predicated region
    $region33: #{tpu_custom_call.1} parent=5 // pred_check
      %p254 = pneg %p253
    $region34: #{tpu_custom_call.1} parent=5 // pred_check_branch
      %256 = sbr.rel (%p254) target = $region36
    $region35: #{tpu_custom_call.1} parent=5 // pred_region
      // Predicated region
      $region37: #{tpu_custom_call.1} parent=35 // pred_check
        %p257 = pneg %p34
      $region38: #{tpu_custom_call.1} parent=35 // pred_check_branch
        %259 = sbr.rel (%p257) target = $region40
      $region39: #{tpu_custom_call.1} parent=35 // pred_region
        %s260 = smul.u32 8, %s14
        %p261 = scmp.lt.s32.totalorder %s260, 15
        %s262 = scalar_select %p261, %s260, 15
        %s263 = smul.addr %s262, 2
        %s264 = scalar_lea.vmem %s0, %s263
        %s265 = smul.u32 8, %s14
      $region40: #{tpu_custom_call.1} parent=35 // pred_fallthru
        _
      // Predicated region
      $region41: #{tpu_custom_call.1} parent=35 // pred_check
        %p266 = pneg %p60
      $region42: #{tpu_custom_call.1} parent=35 // pred_check_branch
        %268 = sbr.rel (%p266) target = $region44
      $region43: #{tpu_custom_call.1} parent=35 // pred_region
        %s269 = smul.u32 8, %s14
        %p270 = scmp.lt.s32.totalorder %s269, 15
        %s271 = scalar_select %p270, %s269, 15
        %s272 = smul.addr %s271, 2
        %s273 = smul.addr %s272, 4
        %s274 = scalar_lea.vmem %s1, %s273
        %s275 = smul.u32 8, %s14
      $region44: #{tpu_custom_call.1} parent=35 // pred_fallthru
        _
      // Predicated region
      $region45: #{tpu_custom_call.1} parent=35 // pred_check
        %p276 = pneg %p86
      $region46: #{tpu_custom_call.1} parent=35 // pred_check_branch
        %278 = sbr.rel (%p276) target = $region48
      $region47: #{tpu_custom_call.1} parent=35 // pred_region
        %s279 = smul.u32 8, %s14
        %p280 = scmp.lt.s32.totalorder %s279, 15
        %s281 = scalar_select %p280, %s279, 15
        %s282 = smul.addr %s281, 4
        %s283 = scalar_lea.vmem %s2, %s282
        %s284 = smul.u32 8, %s14
      $region48: #{tpu_custom_call.1} parent=35 // pred_fallthru
        _
    $region36: #{tpu_custom_call.1} parent=5 // pred_fallthru
      _
    %p285 = scmp.le.s32.totalorder 1, %s14
    %p286 = scmp.lt.s32.totalorder %s14, 3
    %p287 = pnand %p285, %p286
    %p288 = pneg %p287
    // Predicated region
    $region49: #{tpu_custom_call.1} parent=5 // pred_check
      _
    $region50: #{tpu_custom_call.1} parent=5 // pred_check_branch
      %290 = sbr.rel (%p287) target = $region52
    $region51: #{tpu_custom_call.1} parent=5 // pred_region
      %s291 = ssub.s32 %s14, 1
      %s292 = smul.u32 8, %s19
      %p293 = scmp.lt.s32.totalorder %s292, 15
      %s294 = scalar_select %p293, %s292, 15
      %s295 = smul.addr %s294, 2
      %s296 = scalar_lea.vmem %s0, %s295
      %p297 = pneg %p40
      %p298 = pneg %p37
      %s299 = smul.u32 8, %s19
      %p300 = scmp.lt.s32.totalorder %s299, 15
      %s301 = scalar_select %p300, %s299, 15
      %s302 = smul.addr %s301, 2
      %s303 = smul.addr %s302, 4
      %s304 = scalar_lea.vmem %s1, %s303
      %p305 = pneg %p66
      %p306 = pneg %p63
      %s307 = smul.u32 8, %s19
      %p308 = scmp.lt.s32.totalorder %s307, 15
      %s309 = scalar_select %p308, %s307, 15
      %s310 = smul.addr %s309, 4
      %s311 = scalar_lea.vmem %s2, %s310
      %p312 = pneg %p92
      %p313 = pneg %p89
      %p314 = pneg %p113
      %p315 = pneg %p110
      %p316 = pneg %p134
      %p317 = pneg %p131
      %p318 = pneg %p155
      %p319 = pneg %p152
      %p320 = pneg %p176
      %p321 = pneg %p173
      %p322 = pneg %p197
      %p323 = pneg %p194
      %p324 = pneg %p223
      %p325 = pneg %p220
      %s326 = smul.u32 8, %s19
      %p327 = scmp.lt.s32.totalorder %s326, 15
      %s328 = scalar_select %p327, %s326, 15
      %s329 = smul.addr %s328, 4
      %s330 = scalar_lea.vmem %s8, %s329
      %s331 = smul.u32 8, %s19
      %p332 = scmp.lt.s32.totalorder %s331, 15
      %s333 = scalar_select %p332, %s331, 15
      %s334 = smul.addr %s333, 2
      %s335 = scalar_lea.vmem %s0, %s334
      %s336 = smul.u32 8, %s19
      %s337 = smul.u32 8, %s19
      %p338 = scmp.lt.s32.totalorder %s337, 15
      %s339 = scalar_select %p338, %s337, 15
      %s340 = smul.addr %s339, 2
      %s341 = smul.addr %s340, 4
      %s342 = scalar_lea.vmem %s1, %s341
      %s343 = smul.u32 8, %s19
      %s344 = smul.u32 8, %s19
      %p345 = scmp.lt.s32.totalorder %s344, 15
      %s346 = scalar_select %p345, %s344, 15
      %s347 = smul.addr %s346, 4
      %s348 = scalar_lea.vmem %s2, %s347
      %s349 = smul.u32 8, %s19
      %s350 = smul.u32 8, %s19
      %p351 = scmp.lt.s32.totalorder %s350, 15
      %s352 = scalar_select %p351, %s350, 15
      %s353 = smul.addr %s352, 4
      %s354 = scalar_lea.vmem %s8, %s353
      %s355 = smul.u32 8, %s19
      %v357 = vld [vmem:[%s335] sm:$0x3]
      %v358 = vld [vmem:[%s335 + $0x2] sm:$0x3]
      %v359 = vld [vmem:[%s335 + $0x4] sm:$0x3]
      %v360 = vld [vmem:[%s335 + $0x6] sm:$0x3]
      %v361 = vld [vmem:[%s335 + $0x8] sm:$0x3]
      %v362 = vld [vmem:[%s335 + $0xa] sm:$0x3]
      %v363 = vld [vmem:[%s335 + $0xc] sm:$0x3]
      %v364 = vld [vmem:[%s335 + $0xe] sm:$0x3]
      %v365 = vld [vmem:[%s342] sm:$0xf]
      %v366 = vld [vmem:[%s342 + $0x4] sm:$0xf]
      %v367 = vld [vmem:[%s342 + $0x8] sm:$0xf]
      %v368 = vld [vmem:[%s342 + $0xc] sm:$0xf]
      %v369 = vld [vmem:[%s342 + $0x10] sm:$0xf]
      %v370 = vld [vmem:[%s342 + $0x14] sm:$0xf]
      %v371 = vld [vmem:[%s342 + $0x18] sm:$0xf]
      %v372 = vld [vmem:[%s342 + $0x1c] sm:$0xf]
      %v373 = vld [vmem:[%s342 + $0x20] sm:$0xf]
      %v374 = vld [vmem:[%s342 + $0x24] sm:$0xf]
      %v375 = vld [vmem:[%s342 + $0x28] sm:$0xf]
      %v376 = vld [vmem:[%s342 + $0x2c] sm:$0xf]
      %v377 = vld [vmem:[%s342 + $0x30] sm:$0xf]
      %v378 = vld [vmem:[%s342 + $0x34] sm:$0xf]
      %v379 = vld [vmem:[%s342 + $0x38] sm:$0xf]
      %v380 = vld [vmem:[%s342 + $0x3c] sm:$0xf]
      %v383 = vunpack.c.l.b16 %v365
      %v384 = vunpack.c.l.b16 %v366
      %v385 = vpack.c.b16 %v384, %v383
      %vm387 = vcmask 130048
      %v389 = vsel %vm387, %v357, 0
      %391 = vmatpush.bf16.msra.mxu0 0
      %392 = vmatpush.bf16.msra.mxu0 0
      %393 = vmatpush.bf16.msra.mxu0 0
      %394 = vmatpush.bf16.msra.mxu0 0
      %395 = vmatpush.bf16.msra.mxu0 0
      %396 = vmatpush.bf16.msra.mxu0 0
      %397 = vmatpush.bf16.msra.mxu0 0
      %398 = vmatpush.bf16.msra.mxu0 %v385
      %399 = vmatmul.bf16.gmra.mxu0 %v389
      %v400 = vpop.f32.mrf.mxu0
      %v401 = vadd.f32 0.0, %v400
      %v402 = vpop.f32.mrf.mxu0
      %403 = vdwg.mxu0
      %v406 = vunpack.c.l.b16 %v367
      %v407 = vunpack.c.l.b16 %v368
      %v408 = vpack.c.b16 %v407, %v406
      %v411 = vsel %vm387, %v358, 0
      %413 = vmatpush.bf16.msra.mxu0 0
      %414 = vmatpush.bf16.msra.mxu0 0
      %415 = vmatpush.bf16.msra.mxu0 0
      %416 = vmatpush.bf16.msra.mxu0 0
      %417 = vmatpush.bf16.msra.mxu0 0
      %418 = vmatpush.bf16.msra.mxu0 0
      %419 = vmatpush.bf16.msra.mxu0 0
      %420 = vmatpush.bf16.msra.mxu0 %v408
      %421 = vmatmul.bf16.gmra.mxu0 %v411
      %v422 = vpop.f32.mrf.mxu0
      %v423 = vadd.f32 0.0, %v422
      %v424 = vpop.f32.mrf.mxu0
      %425 = vdwg.mxu0
      %v428 = vunpack.c.l.b16 %v369
      %v429 = vunpack.c.l.b16 %v370
      %v430 = vpack.c.b16 %v429, %v428
      %v433 = vsel %vm387, %v359, 0
      %435 = vmatpush.bf16.msra.mxu0 0
      %436 = vmatpush.bf16.msra.mxu0 0
      %437 = vmatpush.bf16.msra.mxu0 0
      %438 = vmatpush.bf16.msra.mxu0 0
      %439 = vmatpush.bf16.msra.mxu0 0
      %440 = vmatpush.bf16.msra.mxu0 0
      %441 = vmatpush.bf16.msra.mxu0 0
      %442 = vmatpush.bf16.msra.mxu0 %v430
      %443 = vmatmul.bf16.gmra.mxu0 %v433
      %v444 = vpop.f32.mrf.mxu0
      %v445 = vadd.f32 0.0, %v444
      %v446 = vpop.f32.mrf.mxu0
      %447 = vdwg.mxu0
      %v450 = vunpack.c.l.b16 %v371
      %v451 = vunpack.c.l.b16 %v372
      %v452 = vpack.c.b16 %v451, %v450
      %v455 = vsel %vm387, %v360, 0
      %457 = vmatpush.bf16.msra.mxu0 0
      %458 = vmatpush.bf16.msra.mxu0 0
      %459 = vmatpush.bf16.msra.mxu0 0
      %460 = vmatpush.bf16.msra.mxu0 0
      %461 = vmatpush.bf16.msra.mxu0 0
      %462 = vmatpush.bf16.msra.mxu0 0
      %463 = vmatpush.bf16.msra.mxu0 0
      %464 = vmatpush.bf16.msra.mxu0 %v452
      %465 = vmatmul.bf16.gmra.mxu0 %v455
      %v466 = vpop.f32.mrf.mxu0
      %v467 = vadd.f32 0.0, %v466
      %v468 = vpop.f32.mrf.mxu0
      %469 = vdwg.mxu0
      %v472 = vunpack.c.l.b16 %v373
      %v473 = vunpack.c.l.b16 %v374
      %v474 = vpack.c.b16 %v473, %v472
      %v477 = vsel %vm387, %v361, 0
      %479 = vmatpush.bf16.msra.mxu0 0
      %480 = vmatpush.bf16.msra.mxu0 0
      %481 = vmatpush.bf16.msra.mxu0 0
      %482 = vmatpush.bf16.msra.mxu0 0
      %483 = vmatpush.bf16.msra.mxu0 0
      %484 = vmatpush.bf16.msra.mxu0 0
      %485 = vmatpush.bf16.msra.mxu0 0
      %486 = vmatpush.bf16.msra.mxu0 %v474
      %487 = vmatmul.bf16.gmra.mxu0 %v477
      %v488 = vpop.f32.mrf.mxu0
      %v489 = vadd.f32 0.0, %v488
      %v490 = vpop.f32.mrf.mxu0
      %491 = vdwg.mxu0
      %v494 = vunpack.c.l.b16 %v375
      %v495 = vunpack.c.l.b16 %v376
      %v496 = vpack.c.b16 %v495, %v494
      %v499 = vsel %vm387, %v362, 0
      %501 = vmatpush.bf16.msra.mxu0 0
      %502 = vmatpush.bf16.msra.mxu0 0
      %503 = vmatpush.bf16.msra.mxu0 0
      %504 = vmatpush.bf16.msra.mxu0 0
      %505 = vmatpush.bf16.msra.mxu0 0
      %506 = vmatpush.bf16.msra.mxu0 0
      %507 = vmatpush.bf16.msra.mxu0 0
      %508 = vmatpush.bf16.msra.mxu0 %v496
      %509 = vmatmul.bf16.gmra.mxu0 %v499
      %v510 = vpop.f32.mrf.mxu0
      %v511 = vadd.f32 0.0, %v510
      %v512 = vpop.f32.mrf.mxu0
      %513 = vdwg.mxu0
      %v516 = vunpack.c.l.b16 %v377
      %v517 = vunpack.c.l.b16 %v378
      %v518 = vpack.c.b16 %v517, %v516
      %v521 = vsel %vm387, %v363, 0
      %523 = vmatpush.bf16.msra.mxu0 0
      %524 = vmatpush.bf16.msra.mxu0 0
      %525 = vmatpush.bf16.msra.mxu0 0
      %526 = vmatpush.bf16.msra.mxu0 0
      %527 = vmatpush.bf16.msra.mxu0 0
      %528 = vmatpush.bf16.msra.mxu0 0
      %529 = vmatpush.bf16.msra.mxu0 0
      %530 = vmatpush.bf16.msra.mxu0 %v518
      %531 = vmatmul.bf16.gmra.mxu0 %v521
      %v532 = vpop.f32.mrf.mxu0
      %v533 = vadd.f32 0.0, %v532
      %v534 = vpop.f32.mrf.mxu0
      %535 = vdwg.mxu0
      %v538 = vunpack.c.l.b16 %v379
      %v539 = vunpack.c.l.b16 %v380
      %v540 = vpack.c.b16 %v539, %v538
      %v543 = vsel %vm387, %v364, 0
      %545 = vmatpush.bf16.msra.mxu0 0
      %546 = vmatpush.bf16.msra.mxu0 0
      %547 = vmatpush.bf16.msra.mxu0 0
      %548 = vmatpush.bf16.msra.mxu0 0
      %549 = vmatpush.bf16.msra.mxu0 0
      %550 = vmatpush.bf16.msra.mxu0 0
      %551 = vmatpush.bf16.msra.mxu0 0
      %552 = vmatpush.bf16.msra.mxu0 %v540
      %553 = vmatmul.bf16.gmra.mxu0 %v543
      %v554 = vpop.f32.mrf.mxu0
      %v555 = vadd.f32 0.0, %v554
      %v556 = vpop.f32.mrf.mxu0
      %557 = vdwg.mxu0
      %v558 = vld [vmem:[%s348] sm:$0xf]
      %v559 = vld [vmem:[%s348 + $0x4] sm:$0xf]
      %v560 = vld [vmem:[%s348 + $0x8] sm:$0xf]
      %v561 = vld [vmem:[%s348 + $0xc] sm:$0xf]
      %v562 = vld [vmem:[%s348 + $0x10] sm:$0xf]
      %v563 = vld [vmem:[%s348 + $0x14] sm:$0xf]
      %v564 = vld [vmem:[%s348 + $0x18] sm:$0xf]
      %v565 = vld [vmem:[%s348 + $0x1c] sm:$0xf]
      %574 = vst [vmem:[#allocation1] ss:$2 sm:$0xff] %v401
      %s575 = scalar_lea.vmem [#allocation1], 1
      %576 = vst [vmem:[%s575] ss:$2 sm:$0xff] %v423
      %s577 = scalar_lea.vmem [#allocation1], 16
      %578 = vst [vmem:[%s577] ss:$2 sm:$0xff] %v445
      %s579 = scalar_lea.vmem [#allocation1], 17
      %580 = vst [vmem:[%s579] ss:$2 sm:$0xff] %v467
      %s581 = scalar_lea.vmem [#allocation1], 32
      %582 = vst [vmem:[%s581] ss:$2 sm:$0xff] %v489
      %s583 = scalar_lea.vmem [#allocation1], 33
      %584 = vst [vmem:[%s583] ss:$2 sm:$0xff] %v511
      %s585 = scalar_lea.vmem [#allocation1], 48
      %586 = vst [vmem:[%s585] ss:$2 sm:$0xff] %v533
      %s587 = scalar_lea.vmem [#allocation1], 49
      %588 = vst [vmem:[%s587] ss:$2 sm:$0xff] %v555
      %v589 = vld.sshfl [vmem:[#allocation1] sm:$0xff pattern:$0x75316420]
      %v590 = vld.sshfl [vmem:[#allocation1 + $0x10] sm:$0xff pattern:$0x75316420]
      %v591 = vld.sshfl [vmem:[#allocation1 + $0x20] sm:$0xff pattern:$0x75316420]
      %v592 = vld.sshfl [vmem:[#allocation1 + $0x30] sm:$0xff pattern:$0x75316420]
      %v597 = vpack.c.bf16 %v590, %v589
      %v598 = vpack.c.bf16 %v592, %v591
      %v599 = vld [vmem:[%s3] sm:$0x3]
      %v600 = vld [vmem:[%s4] sm:$0x1]
      %602 = vset.pattern.permute.xlu0 0
      %603 = vperm.xlu0 %602, %v558
      %v604 = vpop.permute.xlu0 %603
      %v607 = vunpack.c.l.s4 839922192
      %v608 = vunpack.c.0.s8 %v607
      %v609 = vperm.slane %v604, %v608
      %611 = vset.pattern.permute.xlu0 0
      %612 = vperm.xlu0 %611, %v559
      %v613 = vpop.permute.xlu0 %612
      %v616 = vunpack.c.l.s4 839922192
      %v617 = vunpack.c.0.s8 %v616
      %v618 = vperm.slane %v613, %v617
      %620 = vset.pattern.permute.xlu0 0
      %621 = vperm.xlu0 %620, %v560
      %v622 = vpop.permute.xlu0 %621
      %v625 = vunpack.c.l.s4 839922192
      %v626 = vunpack.c.0.s8 %v625
      %v627 = vperm.slane %v622, %v626
      %629 = vset.pattern.permute.xlu0 0
      %630 = vperm.xlu0 %629, %v561
      %v631 = vpop.permute.xlu0 %630
      %v634 = vunpack.c.l.s4 839922192
      %v635 = vunpack.c.0.s8 %v634
      %v636 = vperm.slane %v631, %v635
      %638 = vset.pattern.permute.xlu0 0
      %639 = vperm.xlu0 %638, %v562
      %v640 = vpop.permute.xlu0 %639
      %v643 = vunpack.c.l.s4 839922192
      %v644 = vunpack.c.0.s8 %v643
      %v645 = vperm.slane %v640, %v644
      %647 = vset.pattern.permute.xlu0 0
      %648 = vperm.xlu0 %647, %v563
      %v649 = vpop.permute.xlu0 %648
      %v652 = vunpack.c.l.s4 839922192
      %v653 = vunpack.c.0.s8 %v652
      %v654 = vperm.slane %v649, %v653
      %656 = vset.pattern.permute.xlu0 0
      %657 = vperm.xlu0 %656, %v564
      %v658 = vpop.permute.xlu0 %657
      %v661 = vunpack.c.l.s4 839922192
      %v662 = vunpack.c.0.s8 %v661
      %v663 = vperm.slane %v658, %v662
      %665 = vset.pattern.permute.xlu0 0
      %666 = vperm.xlu0 %665, %v565
      %v667 = vpop.permute.xlu0 %666
      %v670 = vunpack.c.l.s4 839922192
      %v671 = vunpack.c.0.s8 %v670
      %v672 = vperm.slane %v667, %v671
      %v674 = vperm.slane %v600, 0
      %v676 = vrot.slane %v674, 4
      %v678 = vmul.f32 %v609, %v674
      %v679 = vmul.f32 %v618, %v676
      %v680 = vmul.f32 %v627, %v674
      %v681 = vmul.f32 %v636, %v676
      %v682 = vmul.f32 %v645, %v674
      %v683 = vmul.f32 %v654, %v676
      %v684 = vmul.f32 %v663, %v674
      %v685 = vmul.f32 %v672, %v676
      %694 = vst [vmem:[#allocation1] ss:$2 sm:$0xff] %v678
      %s695 = scalar_lea.vmem [#allocation1], 1
      %696 = vst [vmem:[%s695] ss:$2 sm:$0xff] %v679
      %s697 = scalar_lea.vmem [#allocation1], 16
      %698 = vst [vmem:[%s697] ss:$2 sm:$0xff] %v680
      %s699 = scalar_lea.vmem [#allocation1], 17
      %700 = vst [vmem:[%s699] ss:$2 sm:$0xff] %v681
      %s701 = scalar_lea.vmem [#allocation1], 32
      %702 = vst [vmem:[%s701] ss:$2 sm:$0xff] %v682
      %s703 = scalar_lea.vmem [#allocation1], 33
      %704 = vst [vmem:[%s703] ss:$2 sm:$0xff] %v683
      %s705 = scalar_lea.vmem [#allocation1], 48
      %706 = vst [vmem:[%s705] ss:$2 sm:$0xff] %v684
      %s707 = scalar_lea.vmem [#allocation1], 49
      %708 = vst [vmem:[%s707] ss:$2 sm:$0xff] %v685
      %v709 = vld.sshfl [vmem:[#allocation1] sm:$0xff pattern:$0x75316420]
      %v710 = vld.sshfl [vmem:[#allocation1 + $0x10] sm:$0xff pattern:$0x75316420]
      %v711 = vld.sshfl [vmem:[#allocation1 + $0x20] sm:$0xff pattern:$0x75316420]
      %v712 = vld.sshfl [vmem:[#allocation1 + $0x30] sm:$0xff pattern:$0x75316420]
      %vm717 = vcmask 31744
      %v719 = vsel %vm717, %v597, 0
      %v722 = vsel %vm717, %v598, 0
      %vm724 = vcmask 1041408
      %v726 = vsel %vm724, %v599, 0
      %728 = vmatpush.bf16.msra.mxu0 0
      %729 = vmatpush.bf16.msra.mxu0 0
      %730 = vmatpush.bf16.msra.mxu0 0
      %731 = vmatpush.bf16.msra.mxu0 0
      %732 = vmatpush.bf16.msra.mxu0 0
      %733 = vmatpush.bf16.msra.mxu0 0
      %734 = vmatpush.bf16.msra.mxu0 0
      %735 = vmatpush.bf16.msra.mxu0 %v726
      %736 = vmatmul.bf16.gmra.mxu0 %v719
      %v737 = vpop.f32.mrf.mxu0
      %v738 = vadd.f32 %v709, %v737
      %v739 = vpop.f32.mrf.mxu0
      %v740 = vadd.f32 %v710, %v739
      %741 = vmatmul.bf16.gmra.mxu0 %v722
      %v742 = vpop.f32.mrf.mxu0
      %v743 = vadd.f32 %v711, %v742
      %v744 = vpop.f32.mrf.mxu0
      %v745 = vadd.f32 %v712, %v744
      %746 = vdwg.mxu0
      %v747 = vld [vmem:[%s5] sm:$0x1]
      %v749 = vperm.slane %v747, 0
      %v751 = vadd.f32 %v738, %v749
      %v752 = vadd.f32 %v740, %v749
      %v753 = vadd.f32 %v743, %v749
      %v754 = vadd.f32 %v745, %v749
      %v755 = vmax.f32 %v751, 0.0
      %v756 = vmax.f32 %v752, 0.0
      %v757 = vmax.f32 %v753, 0.0
      %v758 = vmax.f32 %v754, 0.0
      %v759 = vpack.c.bf16 %v756, %v755
      %v760 = vpack.c.bf16 %v758, %v757
      %v761 = vld [vmem:[%s6] sm:$0xf]
      %v762 = vld [vmem:[%s6 + $0x4] sm:$0xf]
      %v763 = vld [vmem:[%s7] sm:$0x1]
      %v765 = vperm.slane %v763, 0
      %v769 = vunpack.c.l.b16 %v761
      %v770 = vunpack.c.l.b16 %v762
      %v771 = vpack.c.b16 %v770, %v769
      %v774 = vsel %vm387, %v759, 0
      %v777 = vsel %vm387, %v760, 0
      %779 = vmatpush.bf16.msra.mxu0 0
      %780 = vmatpush.bf16.msra.mxu0 0
      %781 = vmatpush.bf16.msra.mxu0 0
      %782 = vmatpush.bf16.msra.mxu0 0
      %783 = vmatpush.bf16.msra.mxu0 0
      %784 = vmatpush.bf16.msra.mxu0 0
      %785 = vmatpush.bf16.msra.mxu0 0
      %786 = vmatpush.bf16.msra.mxu0 %v771
      %787 = vmatmul.bf16.gmra.mxu0 %v774
      %v788 = vpop.f32.mrf.mxu0
      %v789 = vadd.f32 %v765, %v788
      %v790 = vpop.f32.mrf.mxu0
      %v791 = vadd.f32 %v765, %v790
      %792 = vmatmul.bf16.gmra.mxu0 %v777
      %v793 = vpop.f32.mrf.mxu0
      %v794 = vadd.f32 %v765, %v793
      %v795 = vpop.f32.mrf.mxu0
      %v796 = vadd.f32 %v765, %v795
      %797 = vdwg.mxu0
      %v798 = vxor.u32 %v789, 2147483648
      %v799 = vxor.u32 %v791, 2147483648
      %v800 = vxor.u32 %v794, 2147483648
      %v801 = vxor.u32 %v796, 2147483648
      %v802 = vmul.f32 %v798, 1.442695
      %v803 = vpow.pop %v802
      %v804 = vmul.f32 %v799, 1.442695
      %v805 = vpow.pop %v804
      %v806 = vmul.f32 %v800, 1.442695
      %v807 = vpow.pop %v806
      %v808 = vmul.f32 %v801, 1.442695
      %v809 = vpow.pop %v808
      %v810 = vadd.f32 %v803, 1.0
      %v811 = vadd.f32 %v805, 1.0
      %v812 = vadd.f32 %v807, 1.0
      %v813 = vadd.f32 %v809, 1.0
      %v814 = vrcp.pop %v810
      %v815 = vmul.f32 %v810, %v814
      %v816 = vsub.f32 1.0, %v815
      %v817 = vmul.f32 %v814, %v816
      %v818 = vadd.f32 %v814, %v817
      %vm819 = vweird.f32 %v810
      %vm820 = vweird.f32 %v814
      %vm821 = vmor %vm819, %vm820
      %v822 = vsel %vm821, %v814, %v818
      %v823 = vand.u32 2147483647, %v810
      %vm824 = vcmp.eq.f32.partialorder %v823, 8.507059e+37
      %v825 = vand.u32 %v810, 2147483648
      %v826 = vor.u32 1.1754944e-38, %v825
      %v827 = vsel %vm824, %v826, %v822
      %v828 = vmul.f32 1.0, %v827
      %v829 = vrcp.pop %v811
      %v830 = vmul.f32 %v811, %v829
      %v831 = vsub.f32 1.0, %v830
      %v832 = vmul.f32 %v829, %v831
      %v833 = vadd.f32 %v829, %v832
      %vm834 = vweird.f32 %v811
      %vm835 = vweird.f32 %v829
      %vm836 = vmor %vm834, %vm835
      %v837 = vsel %vm836, %v829, %v833
      %v838 = vand.u32 2147483647, %v811
      %vm839 = vcmp.eq.f32.partialorder %v838, 8.507059e+37
      %v840 = vand.u32 %v811, 2147483648
      %v841 = vor.u32 1.1754944e-38, %v840
      %v842 = vsel %vm839, %v841, %v837
      %v843 = vmul.f32 1.0, %v842
      %v844 = vrcp.pop %v812
      %v845 = vmul.f32 %v812, %v844
      %v846 = vsub.f32 1.0, %v845
      %v847 = vmul.f32 %v844, %v846
      %v848 = vadd.f32 %v844, %v847
      %vm849 = vweird.f32 %v812
      %vm850 = vweird.f32 %v844
      %vm851 = vmor %vm849, %vm850
      %v852 = vsel %vm851, %v844, %v848
      %v853 = vand.u32 2147483647, %v812
      %vm854 = vcmp.eq.f32.partialorder %v853, 8.507059e+37
      %v855 = vand.u32 %v812, 2147483648
      %v856 = vor.u32 1.1754944e-38, %v855
      %v857 = vsel %vm854, %v856, %v852
      %v858 = vmul.f32 1.0, %v857
      %v859 = vrcp.pop %v813
      %v860 = vmul.f32 %v813, %v859
      %v861 = vsub.f32 1.0, %v860
      %v862 = vmul.f32 %v859, %v861
      %v863 = vadd.f32 %v859, %v862
      %vm864 = vweird.f32 %v813
      %vm865 = vweird.f32 %v859
      %vm866 = vmor %vm864, %vm865
      %v867 = vsel %vm866, %v859, %v863
      %v868 = vand.u32 2147483647, %v813
      %vm869 = vcmp.eq.f32.partialorder %v868, 8.507059e+37
      %v870 = vand.u32 %v813, 2147483648
      %v871 = vor.u32 1.1754944e-38, %v870
      %v872 = vsel %vm869, %v871, %v867
      %v873 = vmul.f32 1.0, %v872
      %v878 = vrot.slane %v828, 4
      %v879 = vrot.slane %v843, 4
      %v880 = vrot.slane %v858, 4
      %v881 = vrot.slane %v873, 4
      %vm886 = vcmask 11264
      %887 = vst.msk [vmem:[%s354] sm:$0xf] %vm886, %v828
      %888 = vst.msk [vmem:[%s354 + $0x4] sm:$0xf] %vm886, %v878
      %889 = vst.msk [vmem:[%s354 + $0x8] sm:$0xf] %vm886, %v843
      %890 = vst.msk [vmem:[%s354 + $0xc] sm:$0xf] %vm886, %v879
      %891 = vst.msk [vmem:[%s354 + $0x10] sm:$0xf] %vm886, %v858
      %892 = vst.msk [vmem:[%s354 + $0x14] sm:$0xf] %vm886, %v880
      %893 = vst.msk [vmem:[%s354 + $0x18] sm:$0xf] %vm886, %v873
      %894 = vst.msk [vmem:[%s354 + $0x1c] sm:$0xf] %vm886, %v881
      %s895 = smul.u32 8, %s19
      %p896 = scmp.lt.s32.totalorder %s895, 15
      %s897 = scalar_select %p896, %s895, 15
      %s898 = smul.addr %s897, 4
      %s899 = scalar_lea.vmem %s8, %s898
      // Predicated region
      $region53: #{tpu_custom_call.1} parent=51 // pred_check
        %p900 = pneg %p220
      $region54: #{tpu_custom_call.1} parent=51 // pred_check_branch
        %902 = sbr.rel (%p900) target = $region56
      $region55: #{tpu_custom_call.1} parent=51 // pred_region
        %s903 = smul.u32 8, %s19
      $region56: #{tpu_custom_call.1} parent=51 // pred_fallthru
        _
    $region52: #{tpu_custom_call.1} parent=5 // pred_fallthru
      _
    %p904 = scmp.le.s32.totalorder 2, %s14
    // Predicated region
    $region57: #{tpu_custom_call.1} parent=5 // pred_check
      %p905 = pneg %p904
    $region58: #{tpu_custom_call.1} parent=5 // pred_check_branch
      %907 = sbr.rel (%p905) target = $region60
    $region59: #{tpu_custom_call.1} parent=5 // pred_region
      %s908 = ssub.s32 %s14, 2
      // Predicated region
      $region61: #{tpu_custom_call.1} parent=59 // pred_check
        %p909 = pneg %p226
      $region62: #{tpu_custom_call.1} parent=59 // pred_check_branch
        %911 = sbr.rel (%p909) target = $region64
      $region63: #{tpu_custom_call.1} parent=59 // pred_region
        %s912 = smul.u32 8, %s20
        %p913 = scmp.lt.s32.totalorder %s912, 15
        %s914 = scalar_select %p913, %s912, 15
        %s915 = smul.addr %s914, 4
        %s916 = scalar_lea.vmem %s8, %s915
      $region64: #{tpu_custom_call.1} parent=59 // pred_fallthru
        _
    $region60: #{tpu_custom_call.1} parent=5 // pred_fallthru
      _
  $region6: #{tpu_custom_call.1} parent=0 // loop_footer
    %s18 = sadd.s32 1, %s14
  $region7: #{tpu_custom_call.1} parent=0 // loop_footer_branch
    %13 = sbr.rel target = $region3
  $region8: #{tpu_custom_call.1} parent=0 // loop_exit
    _

</llo_original>
